<compile_context>
chip_gen: v7x
topology: tpu7x:2x2x1
jax: 0.10.0
libtpu: 0.0.40
codegen_flags: <defaults>
</compile_context>

<pallas_src>
import jax
import jax.numpy as jnp
from jax import lax
from jax.experimental import pallas as pl
from jax.experimental.pallas import tpu as pltpu


# --------------------------------------------------------------------------
# Kernel 1: streamed masked mean over the sequence axis.
# --------------------------------------------------------------------------
def masked_mean_kernel(x_ref, m_ref, o_ref, acc_ref, cnt_ref):
    # x_ref:   (TB, TS, E)  input tile (streamed, input dtype)
    # m_ref:   (TB, 1, TS)  lane-dense mask tile (streamed, input dtype)
    # o_ref:   (TB, 1, E)   masked-mean output tile (f32; same block across s)
    # acc_ref: (TB, 1, E)   f32 masked-sum accumulator (VMEM scratch)
    # cnt_ref: (TB, 1, 1)   f32 token-count accumulator (VMEM scratch)
    s = pl.program_id(1)

    @pl.when(s == 0)
    def _init():
        acc_ref[...] = jnp.zeros_like(acc_ref)
        cnt_ref[...] = jnp.zeros_like(cnt_ref)

    x = x_ref[...]                        # keep input dtype (bf16 stays bf16)
    m = m_ref[...]                        # (TB, 1, TS), lane-dense

    # Masked sum on the otherwise-idle MXU: m[b,1,TS] @ x[b,TS,E] -> (b,1,E),
    # accumulated in f32 (exact for a {0,1} mask regardless of input dtype).
    acc_ref[...] += jnp.einsum("bqk,bkd->bqd", m, x,
                               preferred_element_type=jnp.float32)
    # Token count: lane reduction of the mask tile, accumulated in f32.
    cnt_ref[...] += jnp.sum(m.astype(jnp.float32), axis=2, keepdims=True)

    @pl.when(s == pl.num_programs(1) - 1)
    def _finalize():
        cnt = cnt_ref[...]
        cnt = jnp.where(cnt == 0.0, 1.0, cnt)   # masked_fill(word_count==0, 1)
        o_ref[...] = (acc_ref[...] / cnt).astype(o_ref.dtype)   # exact divide


# --------------------------------------------------------------------------
# Kernel 2: Linear(E, E) + tanh on the (B, E) mean.
# --------------------------------------------------------------------------
def linear_tanh_kernel(x_ref, w_ref, b_ref, o_ref):
    # x_ref: (TB, E) f32 mean; w_ref: (E, E) weight pre-transposed to (in, out);
    # b_ref: (1, E); o_ref: (TB, E) in the module's output dtype.
    proj = lax.dot_general(
        x_ref[...], w_ref[...],
        dimension_numbers=(((1,), (0,)), ((), ())),      # canonical MXU feed
        preferred_element_type=jnp.float32)
    o_ref[...] = jnp.tanh(proj + b_ref[...].astype(jnp.float32)).astype(o_ref.dtype)


# --------------------------------------------------------------------------
# Wrapper.
# --------------------------------------------------------------------------
def _round_up(x, m):
    return ((x + m - 1) // m) * m


def _resident_spec(shape):
    """Constant-index (VMEM-resident) BlockSpec; single-buffered when the
    installed Pallas supports pipeline_mode=pl.Buffered(1)."""
    index_map = lambda i: (0,) * len(shape)
    try:
        return pl.BlockSpec(shape, index_map, pipeline_mode=pl.Buffered(1))
    except (TypeError, AttributeError):
        return pl.BlockSpec(shape, index_map)


def fs_encoder(inputs, input_mask, weight, bias):
    """inputs: (B,S,E); input_mask: (B,S) in {0,1}; weight: (E,E) in PyTorch
    Linear layout [out,in]; bias: (E,)."""
    B, S, E = inputs.shape
    in_dtype = inputs.dtype
    isz = inputs.dtype.itemsize

    # ---- Batch tile: up to 128 rows; keep >= 2 batch blocks when B allows
    # (megacore sharding of the "parallel" axis on v7x). ----
    B8 = _round_up(B, 8)
    if B8 <= 8:
        TB = B8
    else:
        TB = min(128, _round_up((B8 + 1) // 2, 8))
    B_pad = _round_up(B8, TB)

    # ---- Per-chip VMEM budget -> sequence tile (multiple of 128 lanes). ----
    try:
        vmem_cap = pltpu.get_tpu_info().vmem_capacity_bytes
    except Exception:
        vmem_cap = 64 * 1024 * 1024            # conservative: v7x per-TC VMEM
    vmem_budget = min(int(vmem_cap * 0.75), 100 * 1024 * 1024)
    # Non-TS-dependent VMEM (padded sizes): out block x2 buffers + scratch + slack.
    fixed = (2 * TB * 8 * E * 4        # (TB,1,E) f32 out, 1->8 sublane pad, 2 bufs
             + TB * 8 * E * 4          # acc scratch (1->8 sublane pad)
             + TB * 8 * 128 * 4        # cnt scratch (sublane + lane pad)
             + 4 * 1024 * 1024)        # Mosaic internal slack
    # Per-sequence-row bytes: x (2 buffers) + mask (2 buffers, 1->8 sublane pad).
    per_ts = 2 * TB * E * isz + 2 * TB * 8 * isz
    ts_budget = max(128, (vmem_budget - fixed) // per_ts)
    ts_cap = max(128, (32 * 1024 * 1024) // (TB * E * isz))   # ~32 MiB x tile
    TS = min(int(ts_budget), int(ts_cap), _round_up(S, 128))
    TS = max(128, (TS // 128) * 128)
    S_pad = _round_up(S, TS)

    # ---- Zero-pad batch / sequence (exact: padded mask rows add nothing). ----
    x_p = jnp.pad(inputs, ((0, B_pad - B), (0, S_pad - S), (0, 0)))
    m_p = jnp.pad(input_mask.astype(in_dtype),
                  ((0, B_pad - B), (0, S_pad - S)))[:, None, :]   # (B_pad,1,S_pad)
    w_t = weight.T                      # (in, out) layout, one-time E^2 transpose
    b2 = bias.reshape(1, E)

    # ---- Pass 1: streamed masked mean. ----
    grid = (B_pad // TB, S_pad // TS)
    mean = pl.pallas_call(
        masked_mean_kernel,
        out_shape=jax.ShapeDtypeStruct((B_pad, 1, E), jnp.float32),
        grid_spec=pltpu.PrefetchScalarGridSpec(
            num_scalar_prefetch=0,
            grid=grid,
            in_specs=[
                pl.BlockSpec((TB, TS, E), lambda b, s: (b, s, 0)),   # x (streamed)
                pl.BlockSpec((TB, 1, TS), lambda b, s: (b, 0, s)),   # mask (streamed)
            ],
            out_specs=pl.BlockSpec((TB, 1, E), lambda b, s: (b, 0, 0)),
            scratch_shapes=[
                pltpu.VMEM((TB, 1, E), jnp.float32),   # masked-sum accumulator
                pltpu.VMEM((TB, 1, 1), jnp.float32),   # token-count accumulator
            ],
        ),
        compiler_params=pltpu.CompilerParams(
            dimension_semantics=("parallel", "arbitrary"),
            vmem_limit_bytes=vmem_budget,
        ),
    )(x_p, m_p)

    mean2 = mean.reshape(B_pad, E)      # metadata-only reshape in XLA

    # ---- Pass 2: Linear + tanh on the (B, E) mean (tiny). ----
    # TODO(synk): for very large E (E^2*4 > ~32 MiB) the weight should be
    # K/N-tiled instead of held as a single resident block.
    out = pl.pallas_call(
        linear_tanh_kernel,
        out_shape=jax.ShapeDtypeStruct((B_pad, E), in_dtype),
        grid_spec=pltpu.PrefetchScalarGridSpec(
            num_scalar_prefetch=0,
            grid=(B_pad // TB,),
            in_specs=[
                pl.BlockSpec((TB, E), lambda i: (i, 0)),   # mean (streamed)
                _resident_spec((E, E)),                    # weight (single-buffered)
                _resident_spec((1, E)),                    # bias
            ],
            out_specs=pl.BlockSpec((TB, E), lambda i: (i, 0)),
        ),
        compiler_params=pltpu.CompilerParams(
            dimension_semantics=("parallel",),
            vmem_limit_bytes=vmem_budget,
        ),
    )(mean2, w_t, b2)

    return out[:B]


def fs_encoder_ref(inputs, input_mask, weight, bias):
    """Pure-JAX reference mirroring the PyTorch forward."""
    m = input_mask.astype(jnp.float32)
    inputs_sum = jnp.sum(inputs.astype(jnp.float32) * m[:, :, None], axis=1)
    wc = jnp.sum(m, axis=1)
    wc = jnp.where(wc == 0.0, 1.0, wc)[:, None]
    mean = inputs_sum / wc
    return jnp.tanh(mean @ weight.T + bias).astype(inputs.dtype)


if __name__ == "__main__":
    # Small shapes implied by the module: batch=2, seq=8, embedding_size=32.
    B, S, E = 2, 8, 32
    key = jax.random.PRNGKey(0)
    k_x, k_w = jax.random.split(key, 2)

    inputs = jax.random.normal(k_x, (B, S, E), dtype=jnp.float32)

    # Mask: second half of the sequence padded out for batch element 1.
    mask = jnp.ones((B, S), dtype=jnp.float32)
    mask = mask.at[1, S // 2:].set(0.0)

    # Deterministic params matching nn.Linear(E, E) + initialize_parameters():
    # Xavier-normal-like weight, zero bias.
    xavier_std = (2.0 / (E + E)) ** 0.5
    weight = xavier_std * jax.random.normal(k_w, (E, E), dtype=jnp.float32)
    bias = jnp.zeros((E,), dtype=jnp.float32)

    out = fs_encoder(inputs, mask, weight, bias)
    out = jax.block_until_ready(out)

    ref = fs_encoder_ref(inputs, mask, weight, bias)
    assert out.shape == (B, E)
    assert jnp.allclose(out, ref, atol=1e-4, rtol=1e-4)

    print("KERNEL_OK")
</pallas_src>

<mosaic_0001>
module attributes {stable_mosaic.version = 11 : i64} {
  func.func @masked_mean_kernel(%arg0: i32, %arg1: i32, %arg2: memref<8x128x32xf32, #tpu.memory_space<vmem>>, %arg3: memref<8x1x128xf32, #tpu.memory_space<vmem>>, %arg4: memref<8x1x32xf32, #tpu.memory_space<vmem>>, %arg5: memref<8x1x32xf32, #tpu.memory_space<vmem>>, %arg6: memref<8x1x1xf32, #tpu.memory_space<vmem>>) attributes {dimension_semantics = [#tpu.dimension_semantics<parallel>, #tpu.dimension_semantics<arbitrary>], iteration_bounds = array<i64: 1, 1>, scalar_prefetch = 0 : i64, scratch_operands = 2 : i64, tpu.core_type = #tpu.core_type<tc>, window_params = [{transform_indices = @transform_0, window_bounds = array<i64: 8, 128, 32>}, {transform_indices = @transform_1, window_bounds = array<i64: 8, 1, 128>}, {transform_indices = @transform_2, window_bounds = array<i64: 8, 1, 32>}]} {
    %c0_i32 = arith.constant 0 : i32
    %0 = arith.cmpi eq, %arg1, %c0_i32 : i32
    %1 = arith.extui %0 : i1 to i32
    %c0_i32_0 = arith.constant 0 : i32
    %2 = arith.cmpi ne, %1, %c0_i32_0 : i32
    scf.if %2 {
      %cst_21 = arith.constant 0.000000e+00 : f32
      %17 = vector.broadcast %cst_21 : f32 to vector<8x1x32xf32>
      %c0_22 = arith.constant 0 : index
      %c0_23 = arith.constant 0 : index
      %c0_24 = arith.constant 0 : index
      %18 = vector.load %arg5[%c0_22, %c0_23, %c0_24] : memref<8x1x32xf32, #tpu.memory_space<vmem>>, vector<8x1x32xf32>
      tpu.vector_store %arg5[%c0_22, %c0_23, %c0_24], %17 {strides = array<i32>} : memref<8x1x32xf32, #tpu.memory_space<vmem>>, vector<8x1x32xf32>,
      %cst_25 = arith.constant 0.000000e+00 : f32
      %19 = vector.broadcast %cst_25 : f32 to vector<8x1x1xf32>
      %c0_26 = arith.constant 0 : index
      %c0_27 = arith.constant 0 : index
      %c0_28 = arith.constant 0 : index
      %20 = vector.load %arg6[%c0_26, %c0_27, %c0_28] : memref<8x1x1xf32, #tpu.memory_space<vmem>>, vector<8x1x1xf32>
      tpu.vector_store %arg6[%c0_26, %c0_27, %c0_28], %19 {strides = array<i32>} : memref<8x1x1xf32, #tpu.memory_space<vmem>>, vector<8x1x1xf32>,
    } else {
    }
    %c0 = arith.constant 0 : index
    %c0_1 = arith.constant 0 : index
    %c0_2 = arith.constant 0 : index
    %3 = vector.load %arg2[%c0, %c0_1, %c0_2] : memref<8x128x32xf32, #tpu.memory_space<vmem>>, vector<8x128x32xf32>
    %c0_3 = arith.constant 0 : index
    %c0_4 = arith.constant 0 : index
    %c0_5 = arith.constant 0 : index
    %4 = vector.load %arg3[%c0_3, %c0_4, %c0_5] : memref<8x1x128xf32, #tpu.memory_space<vmem>>, vector<8x1x128xf32>
    %c0_6 = arith.constant 0 : index
    %c0_7 = arith.constant 0 : index
    %c0_8 = arith.constant 0 : index
    %5 = vector.load %arg5[%c0_6, %c0_7, %c0_8] : memref<8x1x32xf32, #tpu.memory_space<vmem>>, vector<8x1x32xf32>
    "tpu.trace_start"() <{level = 10 : i32, message = "bqk,bkd->bqd"}> : () -> ()
    %cst = arith.constant dense<0.000000e+00> : vector<8x1x32xf32>
    %6 = tpu.matmul %4, %3, %cst {dimension_numbers = #tpu.dot_dimension_numbers<[2], [1], [1], [2], [0, 0, 0, 1, 1, 2], [0], [0]>} : vector<8x1x128xf32>, vector<8x128x32xf32>, vector<8x1x32xf32> -> vector<8x1x32xf32>
    "tpu.trace_stop"() : () -> ()
    %7 = arith.addf %5, %6 : vector<8x1x32xf32>
    %c0_9 = arith.constant 0 : index
    %c0_10 = arith.constant 0 : index
    %c0_11 = arith.constant 0 : index
    %8 = vector.load %arg5[%c0_9, %c0_10, %c0_11] : memref<8x1x32xf32, #tpu.memory_space<vmem>>, vector<8x1x32xf32>
    tpu.vector_store %arg5[%c0_9, %c0_10, %c0_11], %7 {strides = array<i32>} : memref<8x1x32xf32, #tpu.memory_space<vmem>>, vector<8x1x32xf32>,
    %c0_12 = arith.constant 0 : index
    %c0_13 = arith.constant 0 : index
    %c0_14 = arith.constant 0 : index
    %9 = vector.load %arg6[%c0_12, %c0_13, %c0_14] : memref<8x1x1xf32, #tpu.memory_space<vmem>>, vector<8x1x1xf32>
    %cst_15 = arith.constant dense<0.000000e+00> : vector<8x1xf32>
    %10 = vector.multi_reduction <add>, %4, %cst_15 [2] : vector<8x1x128xf32> to vector<8x1xf32>
    %11 = vector.shape_cast %10 : vector<8x1xf32> to vector<8x1x1xf32>
    %12 = arith.addf %9, %11 : vector<8x1x1xf32>
    %c0_16 = arith.constant 0 : index
    %c0_17 = arith.constant 0 : index
    %c0_18 = arith.constant 0 : index
    %13 = vector.load %arg6[%c0_16, %c0_17, %c0_18] : memref<8x1x1xf32, #tpu.memory_space<vmem>>, vector<8x1x1xf32>
    tpu.vector_store %arg6[%c0_16, %c0_17, %c0_18], %12 {strides = array<i32>} : memref<8x1x1xf32, #tpu.memory_space<vmem>>, vector<8x1x1xf32>,
    %c0_i32_19 = arith.constant 0 : i32
    %14 = arith.cmpi eq, %arg1, %c0_i32_19 : i32
    %15 = arith.extui %14 : i1 to i32
    %c0_i32_20 = arith.constant 0 : i32
    %16 = arith.cmpi ne, %15, %c0_i32_20 : i32
    scf.if %16 {
      %c0_21 = arith.constant 0 : index
      %c0_22 = arith.constant 0 : index
      %c0_23 = arith.constant 0 : index
      %17 = vector.load %arg6[%c0_21, %c0_22, %c0_23] : memref<8x1x1xf32, #tpu.memory_space<vmem>>, vector<8x1x1xf32>
      %cst_24 = arith.constant 0.000000e+00 : f32
      %18 = vector.broadcast %cst_24 : f32 to vector<8x1x1xf32>
      %19 = arith.cmpf oeq, %17, %18 : vector<8x1x1xf32>
      %cst_25 = arith.constant 1.000000e+00 : f32
      %20 = vector.broadcast %cst_25 : f32 to vector<8x1x1xf32>
      %21 = arith.select %19, %20, %17 : vector<8x1x1xi1>, vector<8x1x1xf32>
      %c0_26 = arith.constant 0 : index
      %c0_27 = arith.constant 0 : index
      %c0_28 = arith.constant 0 : index
      %22 = vector.load %arg5[%c0_26, %c0_27, %c0_28] : memref<8x1x32xf32, #tpu.memory_space<vmem>>, vector<8x1x32xf32>
      %23 = vector.broadcast %21 : vector<8x1x1xf32> to vector<8x1x32xf32>
      %24 = arith.divf %22, %23 : vector<8x1x32xf32>
      %c0_29 = arith.constant 0 : index
      %c0_30 = arith.constant 0 : index
      %c0_31 = arith.constant 0 : index
      %25 = vector.load %arg4[%c0_29, %c0_30, %c0_31] : memref<8x1x32xf32, #tpu.memory_space<vmem>>, vector<8x1x32xf32>
      tpu.vector_store %arg4[%c0_29, %c0_30, %c0_31], %24 {strides = array<i32>} : memref<8x1x32xf32, #tpu.memory_space<vmem>>, vector<8x1x32xf32>,
    } else {
    }
    return
  }
  func.func @transform_0(%arg0: i32, %arg1: i32) -> (i32, i32, i32) {
    %c0_i32 = arith.constant 0 : i32
    %c0_i32_0 = arith.constant 0 : i32
    return %arg0, %arg1, %c0_i32 : i32, i32, i32
  }
  func.func @transform_1(%arg0: i32, %arg1: i32) -> (i32, i32, i32) {
    %c0_i32 = arith.constant 0 : i32
    %c0_i32_0 = arith.constant 0 : i32
    return %arg0, %c0_i32, %arg1 : i32, i32, i32
  }
  func.func @transform_2(%arg0: i32, %arg1: i32) -> (i32, i32, i32) {
    %c0_i32 = arith.constant 0 : i32
    %c0_i32_0 = arith.constant 0 : i32
    %c0_i32_1 = arith.constant 0 : i32
    return %arg0, %c0_i32, %c0_i32_0 : i32, i32, i32
  }
}

</mosaic_0001>

<llo_original>
// kernel: tpu_custom_call.1
$region0: #{tpu_custom_call.1}
  #allocation0 [shape = 'u32[]', space=smem, size = 0x4, offset = 0x4, fixed_abs, tag = 'smem constant byte address 0x4 - core index']
  #allocation1 [shape = 'u32[144,128]{1,0:T(1,128)}', space=vmem, size = 0x12000, scoped, tag = 'internal scratch']
  #allocation2 [shape = 'f32[8,1,32]{2,1,0:T(1,128)}', space=vmem, size = 0x1000, scoped, tag = 'scratch operand']
  #allocation3 [shape = 'f32[8,1,1]{2,1,0:T(1,128)}', space=vmem, size = 0x1000, scoped, tag = 'scratch operand']
  %s0 = inlined_call_operand.vmem [shape: f32[8,128,32], index: 0, kind: input, shape index: {}]
  %s1 = inlined_call_operand.vmem [shape: f32[8,1,128], index: 1, kind: input, shape index: {}]
  %s2 = inlined_call_operand.hbm [shape: f32[8,1,32], index: 2, kind: output, shape index: {}]
  %s3 = sld [smem:[#allocation0]]
  $region26: #{tpu_custom_call.1} parent=0
    _
  %s5 = ssub.s32 1, %s3
  %s6 = scalar_select 0, %s5, %s3
  $region1: #{tpu_custom_call.1} parent=0
    #allocation4 [shape = 'u8[4096]{0}', space=vmem, size = 0x1000, scoped, tag = 'output window, operand 0, single buffered']
    #allocation5 [shape = 's32[1]{0}', space=sflag, size = 0x4, scoped, tag = 'scoped memory for tpu_custom_call.1']
    %7 = vsyncpa [#allocation5], 0
    // Predicated region
    $region2: #{tpu_custom_call.1} parent=1 // pred_check
      _
    $region3: #{tpu_custom_call.1} parent=1 // pred_check_branch
      %9 = sbr.rel (0) target = $region5
    $region4: #{tpu_custom_call.1} parent=1 // pred_region
      _
    $region5: #{tpu_custom_call.1} parent=1 // pred_fallthru
      _
    // Predicated region
    $region6: #{tpu_custom_call.1} parent=1 // pred_check
      _
    $region7: #{tpu_custom_call.1} parent=1 // pred_check_branch
      %11 = sbr.rel (0) target = $region9
    $region8: #{tpu_custom_call.1} parent=1 // pred_region
      _
    $region9: #{tpu_custom_call.1} parent=1 // pred_fallthru
      _
    %p12 = scmp.eq.s32.totalorder 0, 0
    // Predicated region
    $region10: #{tpu_custom_call.1} parent=1 // pred_check
      %p13 = pneg %p12
    $region11: #{tpu_custom_call.1} parent=1 // pred_check_branch
      %15 = sbr.rel (%p13) target = $region13
    $region12: #{tpu_custom_call.1} parent=1 // pred_region
      %vm16 = vcmask 253952
      %17 = vst.msk [vmem:[#allocation2] sm:$0x1] %vm16, 0.0
      %18 = vst.msk [vmem:[#allocation2 + $0x1] sm:$0x1] %vm16, 0.0
      %19 = vst.msk [vmem:[#allocation2 + $0x2] sm:$0x1] %vm16, 0.0
      %20 = vst.msk [vmem:[#allocation2 + $0x3] sm:$0x1] %vm16, 0.0
      %21 = vst.msk [vmem:[#allocation2 + $0x4] sm:$0x1] %vm16, 0.0
      %22 = vst.msk [vmem:[#allocation2 + $0x5] sm:$0x1] %vm16, 0.0
      %23 = vst.msk [vmem:[#allocation2 + $0x6] sm:$0x1] %vm16, 0.0
      %24 = vst.msk [vmem:[#allocation2 + $0x7] sm:$0x1] %vm16, 0.0
      %vm25 = vcmask 0
      %26 = vst.msk [vmem:[#allocation3] sm:$0x1] %vm25, 0.0
      %27 = vst.msk [vmem:[#allocation3 + $0x1] sm:$0x1] %vm25, 0.0
      %28 = vst.msk [vmem:[#allocation3 + $0x2] sm:$0x1] %vm25, 0.0
      %29 = vst.msk [vmem:[#allocation3 + $0x3] sm:$0x1] %vm25, 0.0
      %30 = vst.msk [vmem:[#allocation3 + $0x4] sm:$0x1] %vm25, 0.0
      %31 = vst.msk [vmem:[#allocation3 + $0x5] sm:$0x1] %vm25, 0.0
      %32 = vst.msk [vmem:[#allocation3 + $0x6] sm:$0x1] %vm25, 0.0
      %33 = vst.msk [vmem:[#allocation3 + $0x7] sm:$0x1] %vm25, 0.0
    $region13: #{tpu_custom_call.1} parent=1 // pred_fallthru
      _
    %v34 = vld [vmem:[%s0] sm:$0xff]
    %v35 = vld [vmem:[%s0 + $0x8] sm:$0xff]
    %v36 = vld [vmem:[%s0 + $0x10] sm:$0xff]
    %v37 = vld [vmem:[%s0 + $0x18] sm:$0xff]
    %v38 = vld [vmem:[%s0 + $0x20] sm:$0xff]
    %v39 = vld [vmem:[%s0 + $0x28] sm:$0xff]
    %v40 = vld [vmem:[%s0 + $0x30] sm:$0xff]
    %v41 = vld [vmem:[%s0 + $0x38] sm:$0xff]
    %v42 = vld [vmem:[%s0 + $0x40] sm:$0xff]
    %v43 = vld [vmem:[%s0 + $0x48] sm:$0xff]
    %v44 = vld [vmem:[%s0 + $0x50] sm:$0xff]
    %v45 = vld [vmem:[%s0 + $0x58] sm:$0xff]
    %v46 = vld [vmem:[%s0 + $0x60] sm:$0xff]
    %v47 = vld [vmem:[%s0 + $0x68] sm:$0xff]
    %v48 = vld [vmem:[%s0 + $0x70] sm:$0xff]
    %v49 = vld [vmem:[%s0 + $0x78] sm:$0xff]
    %v50 = vld [vmem:[%s0 + $0x80] sm:$0xff]
    %v51 = vld [vmem:[%s0 + $0x88] sm:$0xff]
    %v52 = vld [vmem:[%s0 + $0x90] sm:$0xff]
    %v53 = vld [vmem:[%s0 + $0x98] sm:$0xff]
    %v54 = vld [vmem:[%s0 + $0xa0] sm:$0xff]
    %v55 = vld [vmem:[%s0 + $0xa8] sm:$0xff]
    %v56 = vld [vmem:[%s0 + $0xb0] sm:$0xff]
    %v57 = vld [vmem:[%s0 + $0xb8] sm:$0xff]
    %v58 = vld [vmem:[%s0 + $0xc0] sm:$0xff]
    %v59 = vld [vmem:[%s0 + $0xc8] sm:$0xff]
    %v60 = vld [vmem:[%s0 + $0xd0] sm:$0xff]
    %v61 = vld [vmem:[%s0 + $0xd8] sm:$0xff]
    %v62 = vld [vmem:[%s0 + $0xe0] sm:$0xff]
    %v63 = vld [vmem:[%s0 + $0xe8] sm:$0xff]
    %v64 = vld [vmem:[%s0 + $0xf0] sm:$0xff]
    %v65 = vld [vmem:[%s0 + $0xf8] sm:$0xff]
    %v66 = vld [vmem:[%s0 + $0x100] sm:$0xff]
    %v67 = vld [vmem:[%s0 + $0x108] sm:$0xff]
    %v68 = vld [vmem:[%s0 + $0x110] sm:$0xff]
    %v69 = vld [vmem:[%s0 + $0x118] sm:$0xff]
    %v70 = vld [vmem:[%s0 + $0x120] sm:$0xff]
    %v71 = vld [vmem:[%s0 + $0x128] sm:$0xff]
    %v72 = vld [vmem:[%s0 + $0x130] sm:$0xff]
    %v73 = vld [vmem:[%s0 + $0x138] sm:$0xff]
    %v74 = vld [vmem:[%s0 + $0x140] sm:$0xff]
    %v75 = vld [vmem:[%s0 + $0x148] sm:$0xff]
    %v76 = vld [vmem:[%s0 + $0x150] sm:$0xff]
    %v77 = vld [vmem:[%s0 + $0x158] sm:$0xff]
    %v78 = vld [vmem:[%s0 + $0x160] sm:$0xff]
    %v79 = vld [vmem:[%s0 + $0x168] sm:$0xff]
    %v80 = vld [vmem:[%s0 + $0x170] sm:$0xff]
    %v81 = vld [vmem:[%s0 + $0x178] sm:$0xff]
    %v82 = vld [vmem:[%s0 + $0x180] sm:$0xff]
    %v83 = vld [vmem:[%s0 + $0x188] sm:$0xff]
    %v84 = vld [vmem:[%s0 + $0x190] sm:$0xff]
    %v85 = vld [vmem:[%s0 + $0x198] sm:$0xff]
    %v86 = vld [vmem:[%s0 + $0x1a0] sm:$0xff]
    %v87 = vld [vmem:[%s0 + $0x1a8] sm:$0xff]
    %v88 = vld [vmem:[%s0 + $0x1b0] sm:$0xff]
    %v89 = vld [vmem:[%s0 + $0x1b8] sm:$0xff]
    %v90 = vld [vmem:[%s0 + $0x1c0] sm:$0xff]
    %v91 = vld [vmem:[%s0 + $0x1c8] sm:$0xff]
    %v92 = vld [vmem:[%s0 + $0x1d0] sm:$0xff]
    %v93 = vld [vmem:[%s0 + $0x1d8] sm:$0xff]
    %v94 = vld [vmem:[%s0 + $0x1e0] sm:$0xff]
    %v95 = vld [vmem:[%s0 + $0x1e8] sm:$0xff]
    %v96 = vld [vmem:[%s0 + $0x1f0] sm:$0xff]
    %v97 = vld [vmem:[%s0 + $0x1f8] sm:$0xff]
    %v98 = vld [vmem:[%s0 + $0x200] sm:$0xff]
    %v99 = vld [vmem:[%s0 + $0x208] sm:$0xff]
    %v100 = vld [vmem:[%s0 + $0x210] sm:$0xff]
    %v101 = vld [vmem:[%s0 + $0x218] sm:$0xff]
    %v102 = vld [vmem:[%s0 + $0x220] sm:$0xff]
    %v103 = vld [vmem:[%s0 + $0x228] sm:$0xff]
    %v104 = vld [vmem:[%s0 + $0x230] sm:$0xff]
    %v105 = vld [vmem:[%s0 + $0x238] sm:$0xff]
    %v106 = vld [vmem:[%s0 + $0x240] sm:$0xff]
    %v107 = vld [vmem:[%s0 + $0x248] sm:$0xff]
    %v108 = vld [vmem:[%s0 + $0x250] sm:$0xff]
    %v109 = vld [vmem:[%s0 + $0x258] sm:$0xff]
    %v110 = vld [vmem:[%s0 + $0x260] sm:$0xff]
    %v111 = vld [vmem:[%s0 + $0x268] sm:$0xff]
    %v112 = vld [vmem:[%s0 + $0x270] sm:$0xff]
    %v113 = vld [vmem:[%s0 + $0x278] sm:$0xff]
    %v114 = vld [vmem:[%s0 + $0x280] sm:$0xff]
    %v115 = vld [vmem:[%s0 + $0x288] sm:$0xff]
    %v116 = vld [vmem:[%s0 + $0x290] sm:$0xff]
    %v117 = vld [vmem:[%s0 + $0x298] sm:$0xff]
    %v118 = vld [vmem:[%s0 + $0x2a0] sm:$0xff]
    %v119 = vld [vmem:[%s0 + $0x2a8] sm:$0xff]
    %v120 = vld [vmem:[%s0 + $0x2b0] sm:$0xff]
    %v121 = vld [vmem:[%s0 + $0x2b8] sm:$0xff]
    %v122 = vld [vmem:[%s0 + $0x2c0] sm:$0xff]
    %v123 = vld [vmem:[%s0 + $0x2c8] sm:$0xff]
    %v124 = vld [vmem:[%s0 + $0x2d0] sm:$0xff]
    %v125 = vld [vmem:[%s0 + $0x2d8] sm:$0xff]
    %v126 = vld [vmem:[%s0 + $0x2e0] sm:$0xff]
    %v127 = vld [vmem:[%s0 + $0x2e8] sm:$0xff]
    %v128 = vld [vmem:[%s0 + $0x2f0] sm:$0xff]
    %v129 = vld [vmem:[%s0 + $0x2f8] sm:$0xff]
    %v130 = vld [vmem:[%s0 + $0x300] sm:$0xff]
    %v131 = vld [vmem:[%s0 + $0x308] sm:$0xff]
    %v132 = vld [vmem:[%s0 + $0x310] sm:$0xff]
    %v133 = vld [vmem:[%s0 + $0x318] sm:$0xff]
    %v134 = vld [vmem:[%s0 + $0x320] sm:$0xff]
    %v135 = vld [vmem:[%s0 + $0x328] sm:$0xff]
    %v136 = vld [vmem:[%s0 + $0x330] sm:$0xff]
    %v137 = vld [vmem:[%s0 + $0x338] sm:$0xff]
    %v138 = vld [vmem:[%s0 + $0x340] sm:$0xff]
    %v139 = vld [vmem:[%s0 + $0x348] sm:$0xff]
    %v140 = vld [vmem:[%s0 + $0x350] sm:$0xff]
    %v141 = vld [vmem:[%s0 + $0x358] sm:$0xff]
    %v142 = vld [vmem:[%s0 + $0x360] sm:$0xff]
    %v143 = vld [vmem:[%s0 + $0x368] sm:$0xff]
    %v144 = vld [vmem:[%s0 + $0x370] sm:$0xff]
    %v145 = vld [vmem:[%s0 + $0x378] sm:$0xff]
    %v146 = vld [vmem:[%s0 + $0x380] sm:$0xff]
    %v147 = vld [vmem:[%s0 + $0x388] sm:$0xff]
    %v148 = vld [vmem:[%s0 + $0x390] sm:$0xff]
    %v149 = vld [vmem:[%s0 + $0x398] sm:$0xff]
    %v150 = vld [vmem:[%s0 + $0x3a0] sm:$0xff]
    %v151 = vld [vmem:[%s0 + $0x3a8] sm:$0xff]
    %v152 = vld [vmem:[%s0 + $0x3b0] sm:$0xff]
    %v153 = vld [vmem:[%s0 + $0x3b8] sm:$0xff]
    %v154 = vld [vmem:[%s0 + $0x3c0] sm:$0xff]
    %v155 = vld [vmem:[%s0 + $0x3c8] sm:$0xff]
    %v156 = vld [vmem:[%s0 + $0x3d0] sm:$0xff]
    %v157 = vld [vmem:[%s0 + $0x3d8] sm:$0xff]
    %v158 = vld [vmem:[%s0 + $0x3e0] sm:$0xff]
    %v159 = vld [vmem:[%s0 + $0x3e8] sm:$0xff]
    %v160 = vld [vmem:[%s0 + $0x3f0] sm:$0xff]
    %v161 = vld [vmem:[%s0 + $0x3f8] sm:$0xff]
    %v162 = vld [vmem:[%s1] sm:$0x1]
    %v163 = vld [vmem:[%s1 + $0x1] sm:$0x1]
    %v164 = vld [vmem:[%s1 + $0x2] sm:$0x1]
    %v165 = vld [vmem:[%s1 + $0x3] sm:$0x1]
    %v166 = vld [vmem:[%s1 + $0x4] sm:$0x1]
    %v167 = vld [vmem:[%s1 + $0x5] sm:$0x1]
    %v168 = vld [vmem:[%s1 + $0x6] sm:$0x1]
    %v169 = vld [vmem:[%s1 + $0x7] sm:$0x1]
    %v170 = vld [vmem:[#allocation2] sm:$0x1]
    %v171 = vld [vmem:[#allocation2 + $0x1] sm:$0x1]
    %v172 = vld [vmem:[#allocation2 + $0x2] sm:$0x1]
    %v173 = vld [vmem:[#allocation2 + $0x3] sm:$0x1]
    %v174 = vld [vmem:[#allocation2 + $0x4] sm:$0x1]
    %v175 = vld [vmem:[#allocation2 + $0x5] sm:$0x1]
    %v176 = vld [vmem:[#allocation2 + $0x6] sm:$0x1]
    %v177 = vld [vmem:[#allocation2 + $0x7] sm:$0x1]
    %178 = vmatprep.subr.mxu0 0.0
    %179 = vmatpush1.msra.mxu0 %v34
    %180 = vmatprep.subr.mxu0 0.0
    %181 = vmatpush1.msra.mxu0 %v35
    %182 = vmatprep.subr.mxu0 0.0
    %183 = vmatpush1.msra.mxu0 %v36
    %184 = vmatprep.subr.mxu0 0.0
    %185 = vmatpush1.msra.mxu0 %v37
    %186 = vmatprep.subr.mxu0 0.0
    %187 = vmatpush1.msra.mxu0 %v38
    %188 = vmatprep.subr.mxu0 0.0
    %189 = vmatpush1.msra.mxu0 %v39
    %190 = vmatprep.subr.mxu0 0.0
    %191 = vmatpush1.msra.mxu0 %v40
    %192 = vmatprep.subr.mxu0 0.0
    %193 = vmatpush1.msra.mxu0 %v41
    %194 = vmatprep.subr.mxu0 0.0
    %195 = vmatpush1.msra.mxu0 %v42
    %196 = vmatprep.subr.mxu0 0.0
    %197 = vmatpush1.msra.mxu0 %v43
    %198 = vmatprep.subr.mxu0 0.0
    %199 = vmatpush1.msra.mxu0 %v44
    %200 = vmatprep.subr.mxu0 0.0
    %201 = vmatpush1.msra.mxu0 %v45
    %202 = vmatprep.subr.mxu0 0.0
    %203 = vmatpush1.msra.mxu0 %v46
    %204 = vmatprep.subr.mxu0 0.0
    %205 = vmatpush1.msra.mxu0 %v47
    %206 = vmatprep.subr.mxu0 0.0
    %207 = vmatpush1.msra.mxu0 %v48
    %208 = vmatprep.subr.mxu0 0.0
    %209 = vmatpush1.msra.mxu0 %v49
    %210 = vmatprep.subr.mxu0 0.0
    %211 = vmatpush1.msra.mxu0 0.0
    %212 = vmatprep.subr.mxu0 0.0
    %213 = vmatpush1.msra.mxu0 0.0
    %214 = vmatprep.subr.mxu0 0.0
    %215 = vmatpush1.msra.mxu0 0.0
    %216 = vmatprep.subr.mxu0 0.0
    %217 = vmatpush1.msra.mxu0 0.0
    %218 = vmatprep.subr.mxu0 0.0
    %219 = vmatpush1.msra.mxu0 0.0
    %220 = vmatprep.subr.mxu0 0.0
    %221 = vmatpush1.msra.mxu0 0.0
    %222 = vmatprep.subr.mxu0 0.0
    %223 = vmatpush1.msra.mxu0 0.0
    %224 = vmatprep.subr.mxu0 0.0
    %225 = vmatpush1.msra.mxu0 0.0
    %226 = vmatprep.subr.mxu0 0.0
    %227 = vmatpush1.msra.mxu0 0.0
    %228 = vmatprep.subr.mxu0 0.0
    %229 = vmatpush1.msra.mxu0 0.0
    %230 = vmatprep.subr.mxu0 0.0
    %231 = vmatpush1.msra.mxu0 0.0
    %232 = vmatprep.subr.mxu0 0.0
    %233 = vmatpush1.msra.mxu0 0.0
    %234 = vmatprep.subr.mxu0 0.0
    %235 = vmatpush1.msra.mxu0 0.0
    %236 = vmatprep.subr.mxu0 0.0
    %237 = vmatpush1.msra.mxu0 0.0
    %238 = vmatprep.subr.mxu0 0.0
    %239 = vmatpush1.msra.mxu0 0.0
    %240 = vmatprep.subr.mxu0 0.0
    %241 = vmatpush1.msra.mxu0 0.0
    %242 = vmatprep.mubr.f32.mxu0 0.0
    %243 = vmatmul.mubr.f32.gmra.mrb[0].mxu0 %v162
    %v244 = vpop.f32.mrb[0].mxu0
    %v245 = vadd.f32 0.0, %v244
    %v246 = vpop.f32.mrb[0].mxu0
    %247 = vdwg.mxu0
    %248 = vmatprep.subr.mxu0 0.0
    %249 = vmatpush1.msra.mxu0 %v50
    %250 = vmatprep.subr.mxu0 0.0
    %251 = vmatpush1.msra.mxu0 %v51
    %252 = vmatprep.subr.mxu0 0.0
    %253 = vmatpush1.msra.mxu0 %v52
    %254 = vmatprep.subr.mxu0 0.0
    %255 = vmatpush1.msra.mxu0 %v53
    %256 = vmatprep.subr.mxu0 0.0
    %257 = vmatpush1.msra.mxu0 %v54
    %258 = vmatprep.subr.mxu0 0.0
    %259 = vmatpush1.msra.mxu0 %v55
    %260 = vmatprep.subr.mxu0 0.0
    %261 = vmatpush1.msra.mxu0 %v56
    %262 = vmatprep.subr.mxu0 0.0
    %263 = vmatpush1.msra.mxu0 %v57
    %264 = vmatprep.subr.mxu0 0.0
    %265 = vmatpush1.msra.mxu0 %v58
    %266 = vmatprep.subr.mxu0 0.0
    %267 = vmatpush1.msra.mxu0 %v59
    %268 = vmatprep.subr.mxu0 0.0
    %269 = vmatpush1.msra.mxu0 %v60
    %270 = vmatprep.subr.mxu0 0.0
    %271 = vmatpush1.msra.mxu0 %v61
    %272 = vmatprep.subr.mxu0 0.0
    %273 = vmatpush1.msra.mxu0 %v62
    %274 = vmatprep.subr.mxu0 0.0
    %275 = vmatpush1.msra.mxu0 %v63
    %276 = vmatprep.subr.mxu0 0.0
    %277 = vmatpush1.msra.mxu0 %v64
    %278 = vmatprep.subr.mxu0 0.0
    %279 = vmatpush1.msra.mxu0 %v65
    %280 = vmatprep.subr.mxu0 0.0
    %281 = vmatpush1.msra.mxu0 0.0
    %282 = vmatprep.subr.mxu0 0.0
    %283 = vmatpush1.msra.mxu0 0.0
    %284 = vmatprep.subr.mxu0 0.0
    %285 = vmatpush1.msra.mxu0 0.0
    %286 = vmatprep.subr.mxu0 0.0
    %287 = vmatpush1.msra.mxu0 0.0
    %288 = vmatprep.subr.mxu0 0.0
    %289 = vmatpush1.msra.mxu0 0.0
    %290 = vmatprep.subr.mxu0 0.0
    %291 = vmatpush1.msra.mxu0 0.0
    %292 = vmatprep.subr.mxu0 0.0
    %293 = vmatpush1.msra.mxu0 0.0
    %294 = vmatprep.subr.mxu0 0.0
    %295 = vmatpush1.msra.mxu0 0.0
    %296 = vmatprep.subr.mxu0 0.0
    %297 = vmatpush1.msra.mxu0 0.0
    %298 = vmatprep.subr.mxu0 0.0
    %299 = vmatpush1.msra.mxu0 0.0
    %300 = vmatprep.subr.mxu0 0.0
    %301 = vmatpush1.msra.mxu0 0.0
    %302 = vmatprep.subr.mxu0 0.0
    %303 = vmatpush1.msra.mxu0 0.0
    %304 = vmatprep.subr.mxu0 0.0
    %305 = vmatpush1.msra.mxu0 0.0
    %306 = vmatprep.subr.mxu0 0.0
    %307 = vmatpush1.msra.mxu0 0.0
    %308 = vmatprep.subr.mxu0 0.0
    %309 = vmatpush1.msra.mxu0 0.0
    %310 = vmatprep.subr.mxu0 0.0
    %311 = vmatpush1.msra.mxu0 0.0
    %312 = vmatprep.mubr.f32.mxu0 0.0
    %313 = vmatmul.mubr.f32.gmra.mrb[0].mxu0 %v163
    %v314 = vpop.f32.mrb[0].mxu0
    %v315 = vadd.f32 0.0, %v314
    %v316 = vpop.f32.mrb[0].mxu0
    %317 = vdwg.mxu0
    %318 = vmatprep.subr.mxu0 0.0
    %319 = vmatpush1.msra.mxu0 %v66
    %320 = vmatprep.subr.mxu0 0.0
    %321 = vmatpush1.msra.mxu0 %v67
    %322 = vmatprep.subr.mxu0 0.0
    %323 = vmatpush1.msra.mxu0 %v68
    %324 = vmatprep.subr.mxu0 0.0
    %325 = vmatpush1.msra.mxu0 %v69
    %326 = vmatprep.subr.mxu0 0.0
    %327 = vmatpush1.msra.mxu0 %v70
    %328 = vmatprep.subr.mxu0 0.0
    %329 = vmatpush1.msra.mxu0 %v71
    %330 = vmatprep.subr.mxu0 0.0
    %331 = vmatpush1.msra.mxu0 %v72
    %332 = vmatprep.subr.mxu0 0.0
    %333 = vmatpush1.msra.mxu0 %v73
    %334 = vmatprep.subr.mxu0 0.0
    %335 = vmatpush1.msra.mxu0 %v74
    %336 = vmatprep.subr.mxu0 0.0
    %337 = vmatpush1.msra.mxu0 %v75
    %338 = vmatprep.subr.mxu0 0.0
    %339 = vmatpush1.msra.mxu0 %v76
    %340 = vmatprep.subr.mxu0 0.0
    %341 = vmatpush1.msra.mxu0 %v77
    %342 = vmatprep.subr.mxu0 0.0
    %343 = vmatpush1.msra.mxu0 %v78
    %344 = vmatprep.subr.mxu0 0.0
    %345 = vmatpush1.msra.mxu0 %v79
    %346 = vmatprep.subr.mxu0 0.0
    %347 = vmatpush1.msra.mxu0 %v80
    %348 = vmatprep.subr.mxu0 0.0
    %349 = vmatpush1.msra.mxu0 %v81
    %350 = vmatprep.subr.mxu0 0.0
    %351 = vmatpush1.msra.mxu0 0.0
    %352 = vmatprep.subr.mxu0 0.0
    %353 = vmatpush1.msra.mxu0 0.0
    %354 = vmatprep.subr.mxu0 0.0
    %355 = vmatpush1.msra.mxu0 0.0
    %356 = vmatprep.subr.mxu0 0.0
    %357 = vmatpush1.msra.mxu0 0.0
    %358 = vmatprep.subr.mxu0 0.0
    %359 = vmatpush1.msra.mxu0 0.0
    %360 = vmatprep.subr.mxu0 0.0
    %361 = vmatpush1.msra.mxu0 0.0
    %362 = vmatprep.subr.mxu0 0.0
    %363 = vmatpush1.msra.mxu0 0.0
    %364 = vmatprep.subr.mxu0 0.0
    %365 = vmatpush1.msra.mxu0 0.0
    %366 = vmatprep.subr.mxu0 0.0
    %367 = vmatpush1.msra.mxu0 0.0
    %368 = vmatprep.subr.mxu0 0.0
    %369 = vmatpush1.msra.mxu0 0.0
    %370 = vmatprep.subr.mxu0 0.0
    %371 = vmatpush1.msra.mxu0 0.0
    %372 = vmatprep.subr.mxu0 0.0
    %373 = vmatpush1.msra.mxu0 0.0
    %374 = vmatprep.subr.mxu0 0.0
    %375 = vmatpush1.msra.mxu0 0.0
    %376 = vmatprep.subr.mxu0 0.0
    %377 = vmatpush1.msra.mxu0 0.0
    %378 = vmatprep.subr.mxu0 0.0
    %379 = vmatpush1.msra.mxu0 0.0
    %380 = vmatprep.subr.mxu0 0.0
    %381 = vmatpush1.msra.mxu0 0.0
    %382 = vmatprep.mubr.f32.mxu0 0.0
    %383 = vmatmul.mubr.f32.gmra.mrb[0].mxu0 %v164
    %v384 = vpop.f32.mrb[0].mxu0
    %v385 = vadd.f32 0.0, %v384
    %v386 = vpop.f32.mrb[0].mxu0
    %387 = vdwg.mxu0
    %388 = vmatprep.subr.mxu0 0.0
    %389 = vmatpush1.msra.mxu0 %v82
    %390 = vmatprep.subr.mxu0 0.0
    %391 = vmatpush1.msra.mxu0 %v83
    %392 = vmatprep.subr.mxu0 0.0
    %393 = vmatpush1.msra.mxu0 %v84
    %394 = vmatprep.subr.mxu0 0.0
    %395 = vmatpush1.msra.mxu0 %v85
    %396 = vmatprep.subr.mxu0 0.0
    %397 = vmatpush1.msra.mxu0 %v86
    %398 = vmatprep.subr.mxu0 0.0
    %399 = vmatpush1.msra.mxu0 %v87
    %400 = vmatprep.subr.mxu0 0.0
    %401 = vmatpush1.msra.mxu0 %v88
    %402 = vmatprep.subr.mxu0 0.0
    %403 = vmatpush1.msra.mxu0 %v89
    %404 = vmatprep.subr.mxu0 0.0
    %405 = vmatpush1.msra.mxu0 %v90
    %406 = vmatprep.subr.mxu0 0.0
    %407 = vmatpush1.msra.mxu0 %v91
    %408 = vmatprep.subr.mxu0 0.0
    %409 = vmatpush1.msra.mxu0 %v92
    %410 = vmatprep.subr.mxu0 0.0
    %411 = vmatpush1.msra.mxu0 %v93
    %412 = vmatprep.subr.mxu0 0.0
    %413 = vmatpush1.msra.mxu0 %v94
    %414 = vmatprep.subr.mxu0 0.0
    %415 = vmatpush1.msra.mxu0 %v95
    %416 = vmatprep.subr.mxu0 0.0
    %417 = vmatpush1.msra.mxu0 %v96
    %418 = vmatprep.subr.mxu0 0.0
    %419 = vmatpush1.msra.mxu0 %v97
    %420 = vmatprep.subr.mxu0 0.0
    %421 = vmatpush1.msra.mxu0 0.0
    %422 = vmatprep.subr.mxu0 0.0
    %423 = vmatpush1.msra.mxu0 0.0
    %424 = vmatprep.subr.mxu0 0.0
    %425 = vmatpush1.msra.mxu0 0.0
    %426 = vmatprep.subr.mxu0 0.0
    %427 = vmatpush1.msra.mxu0 0.0
    %428 = vmatprep.subr.mxu0 0.0
    %429 = vmatpush1.msra.mxu0 0.0
    %430 = vmatprep.subr.mxu0 0.0
    %431 = vmatpush1.msra.mxu0 0.0
    %432 = vmatprep.subr.mxu0 0.0
    %433 = vmatpush1.msra.mxu0 0.0
    %434 = vmatprep.subr.mxu0 0.0
    %435 = vmatpush1.msra.mxu0 0.0
    %436 = vmatprep.subr.mxu0 0.0
    %437 = vmatpush1.msra.mxu0 0.0
    %438 = vmatprep.subr.mxu0 0.0
    %439 = vmatpush1.msra.mxu0 0.0
    %440 = vmatprep.subr.mxu0 0.0
    %441 = vmatpush1.msra.mxu0 0.0
    %442 = vmatprep.subr.mxu0 0.0
    %443 = vmatpush1.msra.mxu0 0.0
    %444 = vmatprep.subr.mxu0 0.0
    %445 = vmatpush1.msra.mxu0 0.0
    %446 = vmatprep.subr.mxu0 0.0
    %447 = vmatpush1.msra.mxu0 0.0
    %448 = vmatprep.subr.mxu0 0.0
    %449 = vmatpush1.msra.mxu0 0.0
    %450 = vmatprep.subr.mxu0 0.0
    %451 = vmatpush1.msra.mxu0 0.0
    %452 = vmatprep.mubr.f32.mxu0 0.0
    %453 = vmatmul.mubr.f32.gmra.mrb[0].mxu0 %v165
    %v454 = vpop.f32.mrb[0].mxu0
    %v455 = vadd.f32 0.0, %v454
    %v456 = vpop.f32.mrb[0].mxu0
    %457 = vdwg.mxu0
    %458 = vmatprep.subr.mxu0 0.0
    %459 = vmatpush1.msra.mxu0 %v98
    %460 = vmatprep.subr.mxu0 0.0
    %461 = vmatpush1.msra.mxu0 %v99
    %462 = vmatprep.subr.mxu0 0.0
    %463 = vmatpush1.msra.mxu0 %v100
    %464 = vmatprep.subr.mxu0 0.0
    %465 = vmatpush1.msra.mxu0 %v101
    %466 = vmatprep.subr.mxu0 0.0
    %467 = vmatpush1.msra.mxu0 %v102
    %468 = vmatprep.subr.mxu0 0.0
    %469 = vmatpush1.msra.mxu0 %v103
    %470 = vmatprep.subr.mxu0 0.0
    %471 = vmatpush1.msra.mxu0 %v104
    %472 = vmatprep.subr.mxu0 0.0
    %473 = vmatpush1.msra.mxu0 %v105
    %474 = vmatprep.subr.mxu0 0.0
    %475 = vmatpush1.msra.mxu0 %v106
    %476 = vmatprep.subr.mxu0 0.0
    %477 = vmatpush1.msra.mxu0 %v107
    %478 = vmatprep.subr.mxu0 0.0
    %479 = vmatpush1.msra.mxu0 %v108
    %480 = vmatprep.subr.mxu0 0.0
    %481 = vmatpush1.msra.mxu0 %v109
    %482 = vmatprep.subr.mxu0 0.0
    %483 = vmatpush1.msra.mxu0 %v110
    %484 = vmatprep.subr.mxu0 0.0
    %485 = vmatpush1.msra.mxu0 %v111
    %486 = vmatprep.subr.mxu0 0.0
    %487 = vmatpush1.msra.mxu0 %v112
    %488 = vmatprep.subr.mxu0 0.0
    %489 = vmatpush1.msra.mxu0 %v113
    %490 = vmatprep.subr.mxu0 0.0
    %491 = vmatpush1.msra.mxu0 0.0
    %492 = vmatprep.subr.mxu0 0.0
    %493 = vmatpush1.msra.mxu0 0.0
    %494 = vmatprep.subr.mxu0 0.0
    %495 = vmatpush1.msra.mxu0 0.0
    %496 = vmatprep.subr.mxu0 0.0
    %497 = vmatpush1.msra.mxu0 0.0
    %498 = vmatprep.subr.mxu0 0.0
    %499 = vmatpush1.msra.mxu0 0.0
    %500 = vmatprep.subr.mxu0 0.0
    %501 = vmatpush1.msra.mxu0 0.0
    %502 = vmatprep.subr.mxu0 0.0
    %503 = vmatpush1.msra.mxu0 0.0
    %504 = vmatprep.subr.mxu0 0.0
    %505 = vmatpush1.msra.mxu0 0.0
    %506 = vmatprep.subr.mxu0 0.0
    %507 = vmatpush1.msra.mxu0 0.0
    %508 = vmatprep.subr.mxu0 0.0
    %509 = vmatpush1.msra.mxu0 0.0
    %510 = vmatprep.subr.mxu0 0.0
    %511 = vmatpush1.msra.mxu0 0.0
    %512 = vmatprep.subr.mxu0 0.0
    %513 = vmatpush1.msra.mxu0 0.0
    %514 = vmatprep.subr.mxu0 0.0
    %515 = vmatpush1.msra.mxu0 0.0
    %516 = vmatprep.subr.mxu0 0.0
    %517 = vmatpush1.msra.mxu0 0.0
    %518 = vmatprep.subr.mxu0 0.0
    %519 = vmatpush1.msra.mxu0 0.0
    %520 = vmatprep.subr.mxu0 0.0
    %521 = vmatpush1.msra.mxu0 0.0
    %522 = vmatprep.mubr.f32.mxu0 0.0
    %523 = vmatmul.mubr.f32.gmra.mrb[0].mxu0 %v166
    %v524 = vpop.f32.mrb[0].mxu0
    %v525 = vadd.f32 0.0, %v524
    %v526 = vpop.f32.mrb[0].mxu0
    %527 = vdwg.mxu0
    %528 = vmatprep.subr.mxu0 0.0
    %529 = vmatpush1.msra.mxu0 %v114
    %530 = vmatprep.subr.mxu0 0.0
    %531 = vmatpush1.msra.mxu0 %v115
    %532 = vmatprep.subr.mxu0 0.0
    %533 = vmatpush1.msra.mxu0 %v116
    %534 = vmatprep.subr.mxu0 0.0
    %535 = vmatpush1.msra.mxu0 %v117
    %536 = vmatprep.subr.mxu0 0.0
    %537 = vmatpush1.msra.mxu0 %v118
    %538 = vmatprep.subr.mxu0 0.0
    %539 = vmatpush1.msra.mxu0 %v119
    %540 = vmatprep.subr.mxu0 0.0
    %541 = vmatpush1.msra.mxu0 %v120
    %542 = vmatprep.subr.mxu0 0.0
    %543 = vmatpush1.msra.mxu0 %v121
    %544 = vmatprep.subr.mxu0 0.0
    %545 = vmatpush1.msra.mxu0 %v122
    %546 = vmatprep.subr.mxu0 0.0
    %547 = vmatpush1.msra.mxu0 %v123
    %548 = vmatprep.subr.mxu0 0.0
    %549 = vmatpush1.msra.mxu0 %v124
    %550 = vmatprep.subr.mxu0 0.0
    %551 = vmatpush1.msra.mxu0 %v125
    %552 = vmatprep.subr.mxu0 0.0
    %553 = vmatpush1.msra.mxu0 %v126
    %554 = vmatprep.subr.mxu0 0.0
    %555 = vmatpush1.msra.mxu0 %v127
    %556 = vmatprep.subr.mxu0 0.0
    %557 = vmatpush1.msra.mxu0 %v128
    %558 = vmatprep.subr.mxu0 0.0
    %559 = vmatpush1.msra.mxu0 %v129
    %560 = vmatprep.subr.mxu0 0.0
    %561 = vmatpush1.msra.mxu0 0.0
    %562 = vmatprep.subr.mxu0 0.0
    %563 = vmatpush1.msra.mxu0 0.0
    %564 = vmatprep.subr.mxu0 0.0
    %565 = vmatpush1.msra.mxu0 0.0
    %566 = vmatprep.subr.mxu0 0.0
    %567 = vmatpush1.msra.mxu0 0.0
    %568 = vmatprep.subr.mxu0 0.0
    %569 = vmatpush1.msra.mxu0 0.0
    %570 = vmatprep.subr.mxu0 0.0
    %571 = vmatpush1.msra.mxu0 0.0
    %572 = vmatprep.subr.mxu0 0.0
    %573 = vmatpush1.msra.mxu0 0.0
    %574 = vmatprep.subr.mxu0 0.0
    %575 = vmatpush1.msra.mxu0 0.0
    %576 = vmatprep.subr.mxu0 0.0
    %577 = vmatpush1.msra.mxu0 0.0
    %578 = vmatprep.subr.mxu0 0.0
    %579 = vmatpush1.msra.mxu0 0.0
    %580 = vmatprep.subr.mxu0 0.0
    %581 = vmatpush1.msra.mxu0 0.0
    %582 = vmatprep.subr.mxu0 0.0
    %583 = vmatpush1.msra.mxu0 0.0
    %584 = vmatprep.subr.mxu0 0.0
    %585 = vmatpush1.msra.mxu0 0.0
    %586 = vmatprep.subr.mxu0 0.0
    %587 = vmatpush1.msra.mxu0 0.0
    %588 = vmatprep.subr.mxu0 0.0
    %589 = vmatpush1.msra.mxu0 0.0
    %590 = vmatprep.subr.mxu0 0.0
    %591 = vmatpush1.msra.mxu0 0.0
    %592 = vmatprep.mubr.f32.mxu0 0.0
    %593 = vmatmul.mubr.f32.gmra.mrb[0].mxu0 %v167
    %v594 = vpop.f32.mrb[0].mxu0
    %v595 = vadd.f32 0.0, %v594
    %v596 = vpop.f32.mrb[0].mxu0
    %597 = vdwg.mxu0
    %598 = vmatprep.subr.mxu0 0.0
    %599 = vmatpush1.msra.mxu0 %v130
    %600 = vmatprep.subr.mxu0 0.0
    %601 = vmatpush1.msra.mxu0 %v131
    %602 = vmatprep.subr.mxu0 0.0
    %603 = vmatpush1.msra.mxu0 %v132
    %604 = vmatprep.subr.mxu0 0.0
    %605 = vmatpush1.msra.mxu0 %v133
    %606 = vmatprep.subr.mxu0 0.0
    %607 = vmatpush1.msra.mxu0 %v134
    %608 = vmatprep.subr.mxu0 0.0
    %609 = vmatpush1.msra.mxu0 %v135
    %610 = vmatprep.subr.mxu0 0.0
    %611 = vmatpush1.msra.mxu0 %v136
    %612 = vmatprep.subr.mxu0 0.0
    %613 = vmatpush1.msra.mxu0 %v137
    %614 = vmatprep.subr.mxu0 0.0
    %615 = vmatpush1.msra.mxu0 %v138
    %616 = vmatprep.subr.mxu0 0.0
    %617 = vmatpush1.msra.mxu0 %v139
    %618 = vmatprep.subr.mxu0 0.0
    %619 = vmatpush1.msra.mxu0 %v140
    %620 = vmatprep.subr.mxu0 0.0
    %621 = vmatpush1.msra.mxu0 %v141
    %622 = vmatprep.subr.mxu0 0.0
    %623 = vmatpush1.msra.mxu0 %v142
    %624 = vmatprep.subr.mxu0 0.0
    %625 = vmatpush1.msra.mxu0 %v143
    %626 = vmatprep.subr.mxu0 0.0
    %627 = vmatpush1.msra.mxu0 %v144
    %628 = vmatprep.subr.mxu0 0.0
    %629 = vmatpush1.msra.mxu0 %v145
    %630 = vmatprep.subr.mxu0 0.0
    %631 = vmatpush1.msra.mxu0 0.0
    %632 = vmatprep.subr.mxu0 0.0
    %633 = vmatpush1.msra.mxu0 0.0
    %634 = vmatprep.subr.mxu0 0.0
    %635 = vmatpush1.msra.mxu0 0.0
    %636 = vmatprep.subr.mxu0 0.0
    %637 = vmatpush1.msra.mxu0 0.0
    %638 = vmatprep.subr.mxu0 0.0
    %639 = vmatpush1.msra.mxu0 0.0
    %640 = vmatprep.subr.mxu0 0.0
    %641 = vmatpush1.msra.mxu0 0.0
    %642 = vmatprep.subr.mxu0 0.0
    %643 = vmatpush1.msra.mxu0 0.0
    %644 = vmatprep.subr.mxu0 0.0
    %645 = vmatpush1.msra.mxu0 0.0
    %646 = vmatprep.subr.mxu0 0.0
    %647 = vmatpush1.msra.mxu0 0.0
    %648 = vmatprep.subr.mxu0 0.0
    %649 = vmatpush1.msra.mxu0 0.0
    %650 = vmatprep.subr.mxu0 0.0
    %651 = vmatpush1.msra.mxu0 0.0
    %652 = vmatprep.subr.mxu0 0.0
    %653 = vmatpush1.msra.mxu0 0.0
    %654 = vmatprep.subr.mxu0 0.0
    %655 = vmatpush1.msra.mxu0 0.0
    %656 = vmatprep.subr.mxu0 0.0
    %657 = vmatpush1.msra.mxu0 0.0
    %658 = vmatprep.subr.mxu0 0.0
    %659 = vmatpush1.msra.mxu0 0.0
    %660 = vmatprep.subr.mxu0 0.0
    %661 = vmatpush1.msra.mxu0 0.0
    %662 = vmatprep.mubr.f32.mxu0 0.0
    %663 = vmatmul.mubr.f32.gmra.mrb[0].mxu0 %v168
    %v664 = vpop.f32.mrb[0].mxu0
    %v665 = vadd.f32 0.0, %v664
    %v666 = vpop.f32.mrb[0].mxu0
    %667 = vdwg.mxu0
    %668 = vmatprep.subr.mxu0 0.0
    %669 = vmatpush1.msra.mxu0 %v146
    %670 = vmatprep.subr.mxu0 0.0
    %671 = vmatpush1.msra.mxu0 %v147
    %672 = vmatprep.subr.mxu0 0.0
    %673 = vmatpush1.msra.mxu0 %v148
    %674 = vmatprep.subr.mxu0 0.0
    %675 = vmatpush1.msra.mxu0 %v149
    %676 = vmatprep.subr.mxu0 0.0
    %677 = vmatpush1.msra.mxu0 %v150
    %678 = vmatprep.subr.mxu0 0.0
    %679 = vmatpush1.msra.mxu0 %v151
    %680 = vmatprep.subr.mxu0 0.0
    %681 = vmatpush1.msra.mxu0 %v152
    %682 = vmatprep.subr.mxu0 0.0
    %683 = vmatpush1.msra.mxu0 %v153
    %684 = vmatprep.subr.mxu0 0.0
    %685 = vmatpush1.msra.mxu0 %v154
    %686 = vmatprep.subr.mxu0 0.0
    %687 = vmatpush1.msra.mxu0 %v155
    %688 = vmatprep.subr.mxu0 0.0
    %689 = vmatpush1.msra.mxu0 %v156
    %690 = vmatprep.subr.mxu0 0.0
    %691 = vmatpush1.msra.mxu0 %v157
    %692 = vmatprep.subr.mxu0 0.0
    %693 = vmatpush1.msra.mxu0 %v158
    %694 = vmatprep.subr.mxu0 0.0
    %695 = vmatpush1.msra.mxu0 %v159
    %696 = vmatprep.subr.mxu0 0.0
    %697 = vmatpush1.msra.mxu0 %v160
    %698 = vmatprep.subr.mxu0 0.0
    %699 = vmatpush1.msra.mxu0 %v161
    %700 = vmatprep.subr.mxu0 0.0
    %701 = vmatpush1.msra.mxu0 0.0
    %702 = vmatprep.subr.mxu0 0.0
    %703 = vmatpush1.msra.mxu0 0.0
    %704 = vmatprep.subr.mxu0 0.0
    %705 = vmatpush1.msra.mxu0 0.0
    %706 = vmatprep.subr.mxu0 0.0
    %707 = vmatpush1.msra.mxu0 0.0
    %708 = vmatprep.subr.mxu0 0.0
    %709 = vmatpush1.msra.mxu0 0.0
    %710 = vmatprep.subr.mxu0 0.0
    %711 = vmatpush1.msra.mxu0 0.0
    %712 = vmatprep.subr.mxu0 0.0
    %713 = vmatpush1.msra.mxu0 0.0
    %714 = vmatprep.subr.mxu0 0.0
    %715 = vmatpush1.msra.mxu0 0.0
    %716 = vmatprep.subr.mxu0 0.0
    %717 = vmatpush1.msra.mxu0 0.0
    %718 = vmatprep.subr.mxu0 0.0
    %719 = vmatpush1.msra.mxu0 0.0
    %720 = vmatprep.subr.mxu0 0.0
    %721 = vmatpush1.msra.mxu0 0.0
    %722 = vmatprep.subr.mxu0 0.0
    %723 = vmatpush1.msra.mxu0 0.0
    %724 = vmatprep.subr.mxu0 0.0
    %725 = vmatpush1.msra.mxu0 0.0
    %726 = vmatprep.subr.mxu0 0.0
    %727 = vmatpush1.msra.mxu0 0.0
    %728 = vmatprep.subr.mxu0 0.0
    %729 = vmatpush1.msra.mxu0 0.0
    %730 = vmatprep.subr.mxu0 0.0
    %731 = vmatpush1.msra.mxu0 0.0
    %732 = vmatprep.mubr.f32.mxu0 0.0
    %733 = vmatmul.mubr.f32.gmra.mrb[0].mxu0 %v169
    %v734 = vpop.f32.mrb[0].mxu0
    %v735 = vadd.f32 0.0, %v734
    %v736 = vpop.f32.mrb[0].mxu0
    %737 = vdwg.mxu0
    %v738 = vadd.f32 %v170, %v245
    %v739 = vadd.f32 %v171, %v315
    %v740 = vadd.f32 %v172, %v385
    %v741 = vadd.f32 %v173, %v455
    %v742 = vadd.f32 %v174, %v525
    %v743 = vadd.f32 %v175, %v595
    %v744 = vadd.f32 %v176, %v665
    %v745 = vadd.f32 %v177, %v735
    %vm746 = vcmask 253952
    %747 = vst.msk [vmem:[#allocation2] sm:$0x1] %vm746, %v738
    %748 = vst.msk [vmem:[#allocation2 + $0x1] sm:$0x1] %vm746, %v739
    %749 = vst.msk [vmem:[#allocation2 + $0x2] sm:$0x1] %vm746, %v740
    %750 = vst.msk [vmem:[#allocation2 + $0x3] sm:$0x1] %vm746, %v741
    %751 = vst.msk [vmem:[#allocation2 + $0x4] sm:$0x1] %vm746, %v742
    %752 = vst.msk [vmem:[#allocation2 + $0x5] sm:$0x1] %vm746, %v743
    %753 = vst.msk [vmem:[#allocation2 + $0x6] sm:$0x1] %vm746, %v744
    %754 = vst.msk [vmem:[#allocation2 + $0x7] sm:$0x1] %vm746, %v745
    %v755 = vld [vmem:[#allocation3] sm:$0x1]
    %v756 = vld [vmem:[#allocation3 + $0x1] sm:$0x1]
    %v757 = vld [vmem:[#allocation3 + $0x2] sm:$0x1]
    %v758 = vld [vmem:[#allocation3 + $0x3] sm:$0x1]
    %v759 = vld [vmem:[#allocation3 + $0x4] sm:$0x1]
    %v760 = vld [vmem:[#allocation3 + $0x5] sm:$0x1]
    %v761 = vld [vmem:[#allocation3 + $0x6] sm:$0x1]
    %v762 = vld [vmem:[#allocation3 + $0x7] sm:$0x1]
    %vm763 = vcmask 1040384
    %v764 = vsel %vm763, %v162, 0.0
    %765 = vadd.xlane.f32.xlu0 %v764
    %v766 = vpop.xlane.xlu0 %765
    %v767 = vsel %vm763, %v163, 0.0
    %768 = vadd.xlane.f32.xlu0 %v767
    %v769 = vpop.xlane.xlu0 %768
    %v770 = vsel %vm763, %v164, 0.0
    %771 = vadd.xlane.f32.xlu0 %v770
    %v772 = vpop.xlane.xlu0 %771
    %v773 = vsel %vm763, %v165, 0.0
    %774 = vadd.xlane.f32.xlu0 %v773
    %v775 = vpop.xlane.xlu0 %774
    %v776 = vsel %vm763, %v166, 0.0
    %777 = vadd.xlane.f32.xlu0 %v776
    %v778 = vpop.xlane.xlu0 %777
    %v779 = vsel %vm763, %v167, 0.0
    %780 = vadd.xlane.f32.xlu0 %v779
    %v781 = vpop.xlane.xlu0 %780
    %v782 = vsel %vm763, %v168, 0.0
    %783 = vadd.xlane.f32.xlu0 %v782
    %v784 = vpop.xlane.xlu0 %783
    %v785 = vsel %vm763, %v169, 0.0
    %786 = vadd.xlane.f32.xlu0 %v785
    %v787 = vpop.xlane.xlu0 %786
    %v788 = vadd.f32 %v755, %v766
    %v789 = vadd.f32 %v756, %v769
    %v790 = vadd.f32 %v757, %v772
    %v791 = vadd.f32 %v758, %v775
    %v792 = vadd.f32 %v759, %v778
    %v793 = vadd.f32 %v760, %v781
    %v794 = vadd.f32 %v761, %v784
    %v795 = vadd.f32 %v762, %v787
    %vm796 = vcmask 0
    %797 = vst.msk [vmem:[#allocation3] sm:$0x1] %vm796, %v788
    %798 = vst.msk [vmem:[#allocation3 + $0x1] sm:$0x1] %vm796, %v789
    %799 = vst.msk [vmem:[#allocation3 + $0x2] sm:$0x1] %vm796, %v790
    %800 = vst.msk [vmem:[#allocation3 + $0x3] sm:$0x1] %vm796, %v791
    %801 = vst.msk [vmem:[#allocation3 + $0x4] sm:$0x1] %vm796, %v792
    %802 = vst.msk [vmem:[#allocation3 + $0x5] sm:$0x1] %vm796, %v793
    %803 = vst.msk [vmem:[#allocation3 + $0x6] sm:$0x1] %vm796, %v794
    %804 = vst.msk [vmem:[#allocation3 + $0x7] sm:$0x1] %vm796, %v795
    // Predicated region
    $region14: #{tpu_custom_call.1} parent=1 // pred_check
      %p805 = pneg %p12
    $region15: #{tpu_custom_call.1} parent=1 // pred_check_branch
      %807 = sbr.rel (%p805) target = $region17
    $region16: #{tpu_custom_call.1} parent=1 // pred_region
      %v808 = vld [vmem:[#allocation3] sm:$0x1]
      %v809 = vld [vmem:[#allocation3 + $0x1] sm:$0x1]
      %v810 = vld [vmem:[#allocation3 + $0x2] sm:$0x1]
      %v811 = vld [vmem:[#allocation3 + $0x3] sm:$0x1]
      %v812 = vld [vmem:[#allocation3 + $0x4] sm:$0x1]
      %v813 = vld [vmem:[#allocation3 + $0x5] sm:$0x1]
      %v814 = vld [vmem:[#allocation3 + $0x6] sm:$0x1]
      %v815 = vld [vmem:[#allocation3 + $0x7] sm:$0x1]
      %vm816 = vcmp.eq.f32.partialorder %v808, 0.0
      %vm817 = vcmp.eq.f32.partialorder %v809, 0.0
      %vm818 = vcmp.eq.f32.partialorder %v810, 0.0
      %vm819 = vcmp.eq.f32.partialorder %v811, 0.0
      %vm820 = vcmp.eq.f32.partialorder %v812, 0.0
      %vm821 = vcmp.eq.f32.partialorder %v813, 0.0
      %vm822 = vcmp.eq.f32.partialorder %v814, 0.0
      %vm823 = vcmp.eq.f32.partialorder %v815, 0.0
      %v824 = vsel %vm816, 1.0, %v808
      %v825 = vsel %vm817, 1.0, %v809
      %v826 = vsel %vm818, 1.0, %v810
      %v827 = vsel %vm819, 1.0, %v811
      %v828 = vsel %vm820, 1.0, %v812
      %v829 = vsel %vm821, 1.0, %v813
      %v830 = vsel %vm822, 1.0, %v814
      %v831 = vsel %vm823, 1.0, %v815
      %v832 = vld [vmem:[#allocation2] sm:$0x1]
      %v833 = vld [vmem:[#allocation2 + $0x1] sm:$0x1]
      %v834 = vld [vmem:[#allocation2 + $0x2] sm:$0x1]
      %v835 = vld [vmem:[#allocation2 + $0x3] sm:$0x1]
      %v836 = vld [vmem:[#allocation2 + $0x4] sm:$0x1]
      %v837 = vld [vmem:[#allocation2 + $0x5] sm:$0x1]
      %v838 = vld [vmem:[#allocation2 + $0x6] sm:$0x1]
      %v839 = vld [vmem:[#allocation2 + $0x7] sm:$0x1]
      %841 = vset.pattern.permute.xlu0 0
      %842 = vperm.xlu0 %841, %v824
      %v843 = vpop.permute.xlu0 %842
      %v845 = vlaneseq
      %v846 = vshrl.u32 %v845, 7
      %v847 = vsub.s32 0, %v846
      %v848 = vrot.slane %v843, %v847
      %850 = vset.pattern.permute.xlu0 0
      %851 = vperm.xlu0 %850, %v825
      %v852 = vpop.permute.xlu0 %851
      %v854 = vlaneseq
      %v855 = vshrl.u32 %v854, 7
      %v856 = vsub.s32 0, %v855
      %v857 = vrot.slane %v852, %v856
      %859 = vset.pattern.permute.xlu0 0
      %860 = vperm.xlu0 %859, %v826
      %v861 = vpop.permute.xlu0 %860
      %v863 = vlaneseq
      %v864 = vshrl.u32 %v863, 7
      %v865 = vsub.s32 0, %v864
      %v866 = vrot.slane %v861, %v865
      %868 = vset.pattern.permute.xlu0 0
      %869 = vperm.xlu0 %868, %v827
      %v870 = vpop.permute.xlu0 %869
      %v872 = vlaneseq
      %v873 = vshrl.u32 %v872, 7
      %v874 = vsub.s32 0, %v873
      %v875 = vrot.slane %v870, %v874
      %877 = vset.pattern.permute.xlu0 0
      %878 = vperm.xlu0 %877, %v828
      %v879 = vpop.permute.xlu0 %878
      %v881 = vlaneseq
      %v882 = vshrl.u32 %v881, 7
      %v883 = vsub.s32 0, %v882
      %v884 = vrot.slane %v879, %v883
      %886 = vset.pattern.permute.xlu0 0
      %887 = vperm.xlu0 %886, %v829
      %v888 = vpop.permute.xlu0 %887
      %v890 = vlaneseq
      %v891 = vshrl.u32 %v890, 7
      %v892 = vsub.s32 0, %v891
      %v893 = vrot.slane %v888, %v892
      %895 = vset.pattern.permute.xlu0 0
      %896 = vperm.xlu0 %895, %v830
      %v897 = vpop.permute.xlu0 %896
      %v899 = vlaneseq
      %v900 = vshrl.u32 %v899, 7
      %v901 = vsub.s32 0, %v900
      %v902 = vrot.slane %v897, %v901
      %904 = vset.pattern.permute.xlu0 0
      %905 = vperm.xlu0 %904, %v831
      %v906 = vpop.permute.xlu0 %905
      %v908 = vlaneseq
      %v909 = vshrl.u32 %v908, 7
      %v910 = vsub.s32 0, %v909
      %v911 = vrot.slane %v906, %v910
      %v912 = vrcp.pop %v848
      %v913 = vmul.f32 %v832, %v912
      %v914 = vrcp.pop %v857
      %v915 = vmul.f32 %v833, %v914
      %v916 = vrcp.pop %v866
      %v917 = vmul.f32 %v834, %v916
      %v918 = vrcp.pop %v875
      %v919 = vmul.f32 %v835, %v918
      %v920 = vrcp.pop %v884
      %v921 = vmul.f32 %v836, %v920
      %v922 = vrcp.pop %v893
      %v923 = vmul.f32 %v837, %v922
      %v924 = vrcp.pop %v902
      %v925 = vmul.f32 %v838, %v924
      %v926 = vrcp.pop %v911
      %v927 = vmul.f32 %v839, %v926
      %928 = vst.msk [vmem:[#allocation4] sm:$0x1] %vm746, %v913
      %929 = vst.msk [vmem:[#allocation4 + $0x1] sm:$0x1] %vm746, %v915
      %930 = vst.msk [vmem:[#allocation4 + $0x2] sm:$0x1] %vm746, %v917
      %931 = vst.msk [vmem:[#allocation4 + $0x3] sm:$0x1] %vm746, %v919
      %932 = vst.msk [vmem:[#allocation4 + $0x4] sm:$0x1] %vm746, %v921
      %933 = vst.msk [vmem:[#allocation4 + $0x5] sm:$0x1] %vm746, %v923
      %934 = vst.msk [vmem:[#allocation4 + $0x6] sm:$0x1] %vm746, %v925
      %935 = vst.msk [vmem:[#allocation4 + $0x7] sm:$0x1] %vm746, %v927
    $region17: #{tpu_custom_call.1} parent=1 // pred_fallthru
      _
    // Predicated region
    $region18: #{tpu_custom_call.1} parent=1 // pred_check
      _
    $region19: #{tpu_custom_call.1} parent=1 // pred_check_branch
      %937 = sbr.rel (0) target = $region21
    $region20: #{tpu_custom_call.1} parent=1 // pred_region
      %s939 = ssub.s32 128, 128
      %940 = vsyncadd [#allocation5], %s939
      %s941 = sshll.u32 [#allocation4], 4
      %s942 = int_to_ptr.vmem [resolvable:$true] %s941
      %947 = dma.vmem_to_hbm [thread:$0]  %s942, 128, %s2, [#allocation5], 16, 16, 1
    $region21: #{tpu_custom_call.1} parent=1 // pred_fallthru
      _
    // Predicated region
    $region22: #{tpu_custom_call.1} parent=1 // pred_check
      _
    $region23: #{tpu_custom_call.1} parent=1 // pred_check_branch
      %949 = sbr.rel (0) target = $region25
    $region24: #{tpu_custom_call.1} parent=1 // pred_region
      %950 = dma.done [#allocation5], 128
    $region25: #{tpu_custom_call.1} parent=1 // pred_fallthru
      _
    %951 = vsyncpa [#allocation5], 1

</llo_original>
